<compile_context>
chip_gen: v6e
topology: v6e:2x2x1
jax: 0.10.0
libtpu: 0.0.40
codegen_flags: <defaults>
</compile_context>

<pallas_src>
import functools

import jax
import jax.numpy as jnp
from jax.experimental import pallas as pl
from jax.experimental.pallas import tpu as pltpu

_LANE = 128
_SUBLANE = 8
_MAX_TILE_ROWS = 1024  # 1024 x 128 x 4B = 512 KiB per input per block (f32)


def _round_up(n, m):
    return ((n + m - 1) // m) * m


def _l1norm_partial_kernel(x_ref, y_ref, o_ref, *, block_rows, valid_rows,
                           needs_mask):
    x = x_ref[...].astype(jnp.float32)
    y = y_ref[...].astype(jnp.float32)

    if needs_mask:
        # Ragged last block: zero x and y *before* the divide so garbage in
        # out-of-bounds rows cannot create inf/NaN (0/(0+0+1) == 0).
        row0 = pl.program_id(0) * block_rows
        row_ids = row0 + jax.lax.broadcasted_iota(
            jnp.int32, (block_rows, _LANE), 0)
        valid = row_ids < valid_rows
        zero = jnp.float32(0.0)
        x = jnp.where(valid, x, zero)
        y = jnp.where(valid, y, zero)

    val = jnp.abs(x - y) / (x + y + 1.0)

    # Fold the (block_rows, 128) tile onto a single vreg-shaped (8, 128)
    # partial sum with pure VPU adds; the only cross-lane reduction happens
    # once, outside the kernel.
    partial = val.reshape(block_rows // _SUBLANE, _SUBLANE, _LANE).sum(axis=0)
    o_ref[0] = partial


def l1_normalized_loss(output, target):
    """mean(|output - target| / (output + target + 1)) via a Pallas kernel."""
    assert output.shape == target.shape, "output/target shapes must match"
    total_n = output.size

    # Flatten in native dtype (no wrapper-side cast -> no extra HBM traffic).
    x = output.reshape(-1)
    y = target.reshape(-1)

    # Only pad up to the next multiple of 128 (lane width) when needed so the
    # flat arrays can be viewed as (rows, 128). Pad values are exact zeros and
    # contribute 0 to the sum; the mean still divides by the TRUE count.
    rem = total_n % _LANE
    if rem:
        pad = _LANE - rem
        x = jnp.pad(x, (0, pad))
        y = jnp.pad(y, (0, pad))
    rows = x.size // _LANE

    x2 = x.reshape(rows, _LANE)
    y2 = y.reshape(rows, _LANE)

    block_rows = min(_MAX_TILE_ROWS, _round_up(rows, _SUBLANE))
    num_blocks = pl.cdiv(rows, block_rows)
    needs_mask = (rows % block_rows) != 0

    kernel = functools.partial(
        _l1norm_partial_kernel,
        block_rows=block_rows,
        valid_rows=rows,
        needs_mask=needs_mask,
    )

    partials = pl.pallas_call(
        kernel,
        out_shape=jax.ShapeDtypeStruct((num_blocks, _SUBLANE, _LANE),
                                       jnp.float32),
        grid=(num_blocks,),
        in_specs=[
            pl.BlockSpec((block_rows, _LANE), lambda i: (i, 0)),
            pl.BlockSpec((block_rows, _LANE), lambda i: (i, 0)),
        ],
        out_specs=pl.BlockSpec((1, _SUBLANE, _LANE), lambda i: (i, 0, 0)),
        compiler_params=pltpu.CompilerParams(
            dimension_semantics=("parallel",),
        ),
    )(x2, y2)

    # Tiny final reduction + mean in plain JAX.
    return jnp.sum(partials) / jnp.float32(total_n)


if __name__ == "__main__":
    key = jax.random.PRNGKey(0)
    k1, k2 = jax.random.split(key)

    # Small image-style prediction/target pair.
    shape = (2, 4, 16, 16)
    # Non-negative values keep the denominator (x + y + 1) well behaved,
    # matching typical usage of this loss on non-negative targets.
    output = jax.random.uniform(k1, shape, dtype=jnp.float32)
    target = jax.random.uniform(k2, shape, dtype=jnp.float32)

    loss = l1_normalized_loss(output, target)
    loss = jax.block_until_ready(loss)

    # Reference check in plain JAX.
    ref = jnp.mean(jnp.abs(output - target) / (output + target + 1.0))
    assert jnp.allclose(loss, ref, rtol=1e-5, atol=1e-6), (loss, ref)

    print("KERNEL_OK")
</pallas_src>

<mosaic_0001>
module attributes {stable_mosaic.version = 11 : i64} {
  func.func @_l1norm_partial_kernel(%arg0: i32, %arg1: memref<16x128xf32, #tpu.memory_space<vmem>>, %arg2: memref<16x128xf32, #tpu.memory_space<vmem>>, %arg3: memref<1x8x128xf32, #tpu.memory_space<vmem>>) attributes {dimension_semantics = [#tpu.dimension_semantics<parallel>], iteration_bounds = array<i64: 1>, scalar_prefetch = 0 : i64, scratch_operands = 0 : i64, tpu.core_type = #tpu.core_type<tc>, window_params = [{transform_indices = @transform_0, window_bounds = array<i64: 16, 128>}, {transform_indices = @transform_1, window_bounds = array<i64: 16, 128>}, {transform_indices = @transform_2, window_bounds = array<i64: 1, 8, 128>}]} {
    %c0 = arith.constant 0 : index
    %c0_0 = arith.constant 0 : index
    %0 = vector.load %arg1[%c0, %c0_0] : memref<16x128xf32, #tpu.memory_space<vmem>>, vector<16x128xf32>
    %c0_1 = arith.constant 0 : index
    %c0_2 = arith.constant 0 : index
    %1 = vector.load %arg2[%c0_1, %c0_2] : memref<16x128xf32, #tpu.memory_space<vmem>>, vector<16x128xf32>
    %2 = arith.subf %0, %1 : vector<16x128xf32>
    %3 = math.absf %2 : vector<16x128xf32>
    %4 = arith.addf %0, %1 : vector<16x128xf32>
    %cst = arith.constant 1.000000e+00 : f32
    %5 = vector.broadcast %cst : f32 to vector<16x128xf32>
    %6 = arith.addf %4, %5 : vector<16x128xf32>
    %7 = arith.divf %3, %6 : vector<16x128xf32>
    %8 = vector.shape_cast %7 : vector<16x128xf32> to vector<2x8x128xf32>
    %cst_3 = arith.constant dense<0.000000e+00> : vector<8x128xf32>
    %9 = vector.multi_reduction <add>, %8, %cst_3 [0] : vector<2x8x128xf32> to vector<8x128xf32>
    %c0_4 = arith.constant 0 : index
    %c0_5 = arith.constant 0 : index
    %c0_6 = arith.constant 0 : index
    %10 = vector.load %arg3[%c0_4, %c0_5, %c0_6] : memref<1x8x128xf32, #tpu.memory_space<vmem>>, vector<1x8x128xf32>
    %11 = vector.shape_cast %10 : vector<1x8x128xf32> to vector<8x128xf32>
    %12 = vector.shape_cast %9 : vector<8x128xf32> to vector<1x8x128xf32>
    tpu.vector_store %arg3[%c0_4, %c0_5, %c0_6], %12 {strides = array<i32>} : memref<1x8x128xf32, #tpu.memory_space<vmem>>, vector<1x8x128xf32>,
    return
  }
  func.func @transform_0(%arg0: i32) -> (i32, i32) {
    %c0_i32 = arith.constant 0 : i32
    %c0_i32_0 = arith.constant 0 : i32
    return %arg0, %c0_i32 : i32, i32
  }
  func.func @transform_1(%arg0: i32) -> (i32, i32) {
    %c0_i32 = arith.constant 0 : i32
    %c0_i32_0 = arith.constant 0 : i32
    return %arg0, %c0_i32 : i32, i32
  }
  func.func @transform_2(%arg0: i32) -> (i32, i32, i32) {
    %c0_i32 = arith.constant 0 : i32
    %c0_i32_0 = arith.constant 0 : i32
    %c0_i32_1 = arith.constant 0 : i32
    return %arg0, %c0_i32, %c0_i32_0 : i32, i32, i32
  }
}

</mosaic_0001>

<llo_original>
// kernel: tpu_custom_call.1
$region0: #{tpu_custom_call.1}
  #allocation0 [shape = 'u32[]', space=smem, size = 0x4, offset = 0x4, fixed_abs, tag = 'smem constant byte address 0x4 - core index']
  #allocation1 [shape = 'u32[144,128]{1,0:T(1,128)}', space=vmem, size = 0x12000, scoped, tag = 'internal scratch']
  %s0 = inlined_call_operand.hbm [shape: f32[16,128], index: 0, kind: input, shape index: {}]
  %s1 = inlined_call_operand.hbm [shape: f32[16,128], index: 1, kind: input, shape index: {}]
  %s2 = inlined_call_operand.hbm [shape: f32[1,8,128], index: 2, kind: output, shape index: {}]
  %s3 = sld [smem:[#allocation0]]
  $region26: #{tpu_custom_call.1} parent=0
    _
  %s5 = ssub.s32 1, %s3
  %s6 = scalar_select 0, %s5, %s3
  $region1: #{tpu_custom_call.1} parent=0
    #allocation2 [shape = 'u8[8192]{0}', space=vmem, size = 0x2000, scoped, tag = 'input window, operand 0, single buffered']
    #allocation3 [shape = 's32[1]{0}', space=sflag, size = 0x4, scoped, tag = 'scoped memory for tpu_custom_call.1']
    #allocation4 [shape = 's32[1]{0}', space=sflag, size = 0x4, scoped, tag = 'scoped memory for tpu_custom_call.1']
    #allocation5 [shape = 'u8[8192]{0}', space=vmem, size = 0x2000, scoped, tag = 'input window, operand 1, single buffered']
    #allocation6 [shape = 's32[1]{0}', space=sflag, size = 0x4, scoped, tag = 'scoped memory for tpu_custom_call.1']
    #allocation7 [shape = 'u8[4096]{0}', space=vmem, size = 0x1000, scoped, tag = 'output window, operand 0, single buffered']
    %7 = vsyncpa [#allocation3], 0
    %8 = vsyncpa [#allocation6], 0
    %9 = vsyncpa [#allocation4], 0
    // Predicated region
    $region2: #{tpu_custom_call.1} parent=1 // pred_check
      _
    $region3: #{tpu_custom_call.1} parent=1 // pred_check_branch
      %11 = sbr.rel (0) target = $region5
    $region4: #{tpu_custom_call.1} parent=1 // pred_region
      %s13 = ssub.s32 256, 256
      %14 = vsyncadd [#allocation3], %s13
      %s15 = sshll.u32 [#allocation2], 4
      %s16 = int_to_ptr.vmem [resolvable:$true] %s15
      %21 = dma.hbm_to_vmem [thread:$0]  %s0, 256, %s16, [#allocation3], 128, 128, 8
    $region5: #{tpu_custom_call.1} parent=1 // pred_fallthru
      _
    // Predicated region
    $region6: #{tpu_custom_call.1} parent=1 // pred_check
      _
    $region7: #{tpu_custom_call.1} parent=1 // pred_check_branch
      %23 = sbr.rel (0) target = $region9
    $region8: #{tpu_custom_call.1} parent=1 // pred_region
      %s25 = ssub.s32 256, 256
      %26 = vsyncadd [#allocation6], %s25
      %s27 = sshll.u32 [#allocation5], 4
      %s28 = int_to_ptr.vmem [resolvable:$true] %s27
      %33 = dma.hbm_to_vmem [thread:$0]  %s1, 256, %s28, [#allocation6], 128, 128, 8
    $region9: #{tpu_custom_call.1} parent=1 // pred_fallthru
      _
    // Predicated region
    $region10: #{tpu_custom_call.1} parent=1 // pred_check
      _
    $region11: #{tpu_custom_call.1} parent=1 // pred_check_branch
      %35 = sbr.rel (0) target = $region13
    $region12: #{tpu_custom_call.1} parent=1 // pred_region
      %36 = dma.done [#allocation3], 256
    $region13: #{tpu_custom_call.1} parent=1 // pred_fallthru
      _
    // Predicated region
    $region14: #{tpu_custom_call.1} parent=1 // pred_check
      _
    $region15: #{tpu_custom_call.1} parent=1 // pred_check_branch
      %38 = sbr.rel (0) target = $region17
    $region16: #{tpu_custom_call.1} parent=1 // pred_region
      %39 = dma.done [#allocation6], 256
    $region17: #{tpu_custom_call.1} parent=1 // pred_fallthru
      _
    %v40 = vld [vmem:[#allocation2] sm:$0xff]
    %v41 = vld [vmem:[#allocation2 + $0x8] sm:$0xff]
    %v42 = vld [vmem:[#allocation5] sm:$0xff]
    %v43 = vld [vmem:[#allocation5 + $0x8] sm:$0xff]
    %v44 = vsub.f32 %v40, %v42
    %v45 = vsub.f32 %v41, %v43
    %v46 = vand.u32 2147483647, %v44
    %v47 = vand.u32 2147483647, %v45
    %v48 = vadd.f32 %v40, %v42
    %v49 = vadd.f32 %v41, %v43
    %v50 = vadd.f32 %v48, 1.0
    %v51 = vadd.f32 %v49, 1.0
    %v52 = vrcp.pop %v50
    %v53 = vmul.f32 %v46, %v52
    %v54 = vrcp.pop %v51
    %v55 = vmul.f32 %v47, %v54
    %v56 = vadd.f32 %v53, %v55
    %57 = vst [vmem:[#allocation7] sm:$0xff] %v56
    // Predicated region
    $region18: #{tpu_custom_call.1} parent=1 // pred_check
      _
    $region19: #{tpu_custom_call.1} parent=1 // pred_check_branch
      %59 = sbr.rel (0) target = $region21
    $region20: #{tpu_custom_call.1} parent=1 // pred_region
      %s61 = ssub.s32 128, 128
      %62 = vsyncadd [#allocation4], %s61
      %s64 = sshll.u32 [#allocation7], 4
      %s65 = int_to_ptr.vmem [resolvable:$true] %s64
      %67 = dma.vmem_to_hbm [thread:$0]  %s65, 128, %s2, [#allocation4]
    $region21: #{tpu_custom_call.1} parent=1 // pred_fallthru
      _
    // Predicated region
    $region22: #{tpu_custom_call.1} parent=1 // pred_check
      _
    $region23: #{tpu_custom_call.1} parent=1 // pred_check_branch
      %69 = sbr.rel (0) target = $region25
    $region24: #{tpu_custom_call.1} parent=1 // pred_region
      %70 = dma.done [#allocation4], 128
    $region25: #{tpu_custom_call.1} parent=1 // pred_fallthru
      _
    %71 = vsyncpa [#allocation3], 1
    %72 = vsyncpa [#allocation6], 1
    %73 = vsyncpa [#allocation4], 1

</llo_original>
